<compile_context>
chip_gen: v6e
topology: v6e:2x2x1
jax: 0.10.0
libtpu: 0.0.40
codegen_flags: <defaults>
</compile_context>

<pallas_src>
import functools

import jax
import jax.numpy as jnp
from jax.experimental import pallas as pl
from jax.experimental.pallas import tpu as pltpu


def _fold_lanes(x, fold):
    """Sum (R, T) down to (R, fold) with lane-aligned static slices (pure VPU adds, no XLU)."""
    _, t = x.shape
    if t <= fold:
        return x
    k = t // fold
    acc = x[:, :fold]
    for j in range(1, k):
        acc = acc + x[:, j * fold:(j + 1) * fold]
    return acc


def _compound_dice_focal_kernel(logits_ref, labels_ref, alpha_ref, out_ref,
                                sum_y_acc, sum_p_acc, inter_acc, focal_acc,
                                *, gamma, focal_smooth, dice_smooth, hw, ragged):
    t = pl.program_id(1)

    @pl.when(t == 0)
    def _init():
        sum_y_acc[...] = jnp.zeros_like(sum_y_acc)
        sum_p_acc[...] = jnp.zeros_like(sum_p_acc)
        inter_acc[...] = jnp.zeros_like(inter_acc)
        focal_acc[...] = jnp.zeros_like(focal_acc)

    x = logits_ref[0].astype(jnp.float32)        # (C, T)
    labels = labels_ref[0]                       # (1, T) int32
    a_col = alpha_ref[...]                       # (C, 1) normalized class weights

    C, T = x.shape
    fold_w = sum_y_acc.shape[1]

    if ragged:
        # Partial last block: lanes beyond hw hold unspecified data -> sanitize + mask.
        col = jax.lax.broadcasted_iota(jnp.int32, (1, T), 1)
        valid = (t * T + col) < hw
        x = jnp.where(valid, x, 0.0)
        validf = valid.astype(jnp.float32)

    class_ids = jax.lax.broadcasted_iota(jnp.int32, (C, T), 0)
    onehot = (class_ids == labels).astype(jnp.float32)          # (C, T)
    if ragged:
        onehot = onehot * validf   # kills garbage-lane contributions in every term below

    # ---- softmax over the channel (sublane) axis ----
    m = jnp.max(x, axis=0, keepdims=True)                       # (1, T)
    e = jnp.exp(x - m)
    se = jnp.sum(e, axis=0, keepdims=True)                      # (1, T)
    p = e * pl.reciprocal(se)                                   # exact; one recip per pixel

    poh = p * onehot
    p_y = jnp.sum(poh, axis=0, keepdims=True)                   # (1, T) = p[label]

    # ---- focal pieces (label-smoothed one-hot, gamma modulator, alpha[label]) ----
    s = focal_smooth
    pt = (1.0 - s) * p_y + (s / max(C - 1, 1)) * (1.0 - p_y) + s
    logpt = jnp.log(pt)
    one_minus_pt = 1.0 - pt
    if float(gamma) == float(int(gamma)):
        mod = one_minus_pt ** int(gamma)
    else:
        mod = jnp.power(one_minus_pt, jnp.float32(gamma))
    a_pix = jnp.sum(a_col * onehot, axis=0, keepdims=True)      # (1, T); 0 on masked lanes
    focal_pix = -a_pix * mod * logpt                            # (1, T)

    p_for_sum = p * validf if ragged else p

    # ---- deferred accumulation: only lane folds + VPU adds per step ----
    focal_acc[...] += _fold_lanes(focal_pix, fold_w)            # (1, fold_w)
    sum_y_acc[...] += _fold_lanes(onehot, fold_w)               # (C, fold_w)
    sum_p_acc[...] += _fold_lanes(p_for_sum, fold_w)            # (C, fold_w)
    inter_acc[...] += _fold_lanes(poh, fold_w)                  # (C, fold_w)

    @pl.when(t == pl.num_programs(1) - 1)
    def _finalize():
        sum_y_c = jnp.sum(sum_y_acc[...], axis=1, keepdims=True)     # (C, 1)
        sum_p_c = jnp.sum(sum_p_acc[...], axis=1, keepdims=True)
        inter_c = jnp.sum(inter_acc[...], axis=1, keepdims=True)
        w_c = 1.0 / ((sum_y_c + 1e-10) ** 2)                         # GDice class weights
        inter_b = jnp.sum(w_c * inter_c, axis=(0, 1), keepdims=True)              # (1, 1)
        union_b = jnp.sum(w_c * (sum_p_c + sum_y_c), axis=(0, 1), keepdims=True)
        divided_b = -2.0 * (inter_b + dice_smooth) / (union_b + dice_smooth)
        focal_b = jnp.sum(focal_acc[...], axis=(0, 1), keepdims=True)             # (1, 1)
        out_ref[0] = jnp.concatenate(
            [jnp.broadcast_to(divided_b, (1, 128)),
             jnp.broadcast_to(focal_b, (1, 128))], axis=0)           # (2, 128)


def _choose_tile(hw, c, itemsize):
    """Pick a lane-dense spatial tile; returns (tile, ragged)."""
    if hw < 128:
        return hw, False                       # single full-extent block (legal: equals dim)
    budget = 8 * 1024 * 1024                   # double-buffered logits VMEM budget
    cap = (budget // (2 * max(c, 1) * itemsize)) // 128 * 128
    cap = max(128, min(32768, cap))
    if hw % 128 == 0 and hw <= cap:
        return hw, False                       # whole row in one step
    for cand in (32768, 16384, 8192, 4096, 2048, 1024, 512, 256, 128):
        if cand <= cap and hw % cand == 0 and (cand >= 2048 or hw // cand <= 64):
            return cand, False
    # No good divisor: large multiple-of-128 tiles, partial last block masked in-kernel.
    return max(128, min(cap, (hw // 128) * 128)), True


def compound_dice_focal(logits, labels, weights=None, alpha=0.5, gamma=2,
                        focal_smooth=1e-5, dice_smooth=1e-5, tile=None):
    """Pallas implementation of CompoundDiceFocal.forward(logits, labels, weights, alpha)."""
    B, C, H, W = logits.shape
    HW = H * W
    n_pixels = B * H * W

    itemsize = jnp.dtype(logits.dtype).itemsize
    if tile is None:
        tile, ragged = _choose_tile(HW, C, itemsize)
    else:
        assert tile == HW or (tile % 128 == 0 and tile <= HW), "forced tile must be HW or a multiple of 128 <= HW"
        ragged = (HW % tile) != 0

    x = logits.reshape(B, C, HW)                        # view; keep input dtype (bf16 ok)
    lab = labels.reshape(B, 1, HW).astype(jnp.int32)    # works for (B,H,W) or (B,1,H,W) labels

    if weights is None:
        a_col = jnp.ones((C, 1), jnp.float32)           # FocalLoss: alpha=None -> ones (unnormalized)
    else:
        w = jnp.asarray(weights, jnp.float32).reshape(-1)
        a_col = (w / jnp.sum(w)).reshape(C, 1)          # FocalLoss normalizes tensor weights

    num_tiles = pl.cdiv(HW, tile)
    fold_w = min(128, tile)

    kernel = functools.partial(
        _compound_dice_focal_kernel,
        gamma=float(gamma), focal_smooth=float(focal_smooth),
        dice_smooth=float(dice_smooth), hw=HW, ragged=bool(ragged))

    parts = pl.pallas_call(
        kernel,
        out_shape=jax.ShapeDtypeStruct((B, 2, 128), jnp.float32),
        grid_spec=pltpu.PrefetchScalarGridSpec(
            num_scalar_prefetch=0,
            grid=(B, num_tiles),
            in_specs=[
                pl.BlockSpec((1, C, tile), lambda b, t: (b, 0, t)),   # logits tile
                pl.BlockSpec((1, 1, tile), lambda b, t: (b, 0, t)),   # labels tile
                pl.BlockSpec((C, 1), lambda b, t: (0, 0)),            # class weights (resident)
            ],
            out_specs=pl.BlockSpec((1, 2, 128), lambda b, t: (b, 0, 0)),
            scratch_shapes=[
                pltpu.VMEM((C, fold_w), jnp.float32),   # per-class onehot lane-partials
                pltpu.VMEM((C, fold_w), jnp.float32),   # per-class softmax lane-partials
                pltpu.VMEM((C, fold_w), jnp.float32),   # per-class p*onehot lane-partials
                pltpu.VMEM((1, fold_w), jnp.float32),   # focal per-pixel-loss lane-partials
            ],
        ),
        compiler_params=pltpu.CompilerParams(
            dimension_semantics=("parallel", "arbitrary"),
            vmem_limit_bytes=32 * 1024 * 1024),
    )(x, lab, a_col)

    dice_b = parts[:, 0, 0]                       # per-batch GDice "divided"
    focal_sum_b = parts[:, 1, 0]                  # per-batch focal pixel-loss sum
    loss_dice = jnp.mean(dice_b)
    loss_focal = jnp.sum(focal_sum_b) / float(n_pixels)
    return alpha * loss_dice + (1.0 - alpha) * loss_focal


def _reference(logits, labels, weights, alpha, gamma=2.0,
               focal_smooth=1e-5, dice_smooth=1e-5):
    """Pure-JAX re-implementation of the PyTorch forward (f32)."""
    B, C, H, W = logits.shape
    p = jax.nn.softmax(logits.astype(jnp.float32), axis=1)
    onehot = jax.nn.one_hot(labels, C, axis=1, dtype=jnp.float32)   # (B,C,H,W)
    # Generalized Dice
    sum_y = jnp.sum(onehot, axis=(2, 3))
    w_c = 1.0 / ((sum_y + 1e-10) ** 2)
    inter = w_c * jnp.sum(p * onehot, axis=(2, 3))
    union = w_c * (jnp.sum(p, axis=(2, 3)) + sum_y)
    divided = -2.0 * (jnp.sum(inter, axis=1) + dice_smooth) / (jnp.sum(union, axis=1) + dice_smooth)
    gdc = jnp.mean(divided)
    # Focal (label-smoothed, normalized class weights)
    w_norm = weights / jnp.sum(weights)
    p_y = jnp.sum(p * onehot, axis=1)                               # (B,H,W)
    s = focal_smooth
    pt = (1.0 - s) * p_y + (s / (C - 1)) * (1.0 - p_y) + s
    focal = jnp.mean(-w_norm[labels] * (1.0 - pt) ** gamma * jnp.log(pt))
    return alpha * gdc + (1.0 - alpha) * focal


if __name__ == "__main__":
    key = jax.random.PRNGKey(0)
    k_logits, k_labels, k_w = jax.random.split(key, 3)
    alpha = 0.5

    # Primary test: B=2, C=4, H=W=16, f32 logits.
    B, C, H, W = 2, 4, 16, 16
    logits = jax.random.normal(k_logits, (B, C, H, W), dtype=jnp.float32)
    labels = jax.random.randint(k_labels, (B, H, W), 0, C, dtype=jnp.int32)
    weights = jax.random.uniform(k_w, (C,), dtype=jnp.float32) + 0.5

    loss = jax.block_until_ready(compound_dice_focal(logits, labels, weights, alpha, gamma=2))
    ref = jax.block_until_ready(_reference(logits, labels, weights, alpha, gamma=2.0))
    assert jnp.allclose(loss, ref, rtol=1e-4, atol=1e-4), (loss, ref)

    # Ragged spatial extent: exercises partial-last-block + in-kernel lane masking.
    H2, W2 = 10, 13   # HW = 130, forced tile = 128 -> 2 steps, last one masked
    logits2 = jax.random.normal(k_logits, (B, C, H2, W2), dtype=jnp.float32)
    labels2 = jax.random.randint(k_labels, (B, H2, W2), 0, C, dtype=jnp.int32)
    loss2 = jax.block_until_ready(
        compound_dice_focal(logits2, labels2, weights, alpha, gamma=2, tile=128))
    ref2 = jax.block_until_ready(_reference(logits2, labels2, weights, alpha, gamma=2.0))
    assert jnp.allclose(loss2, ref2, rtol=1e-4, atol=1e-4), (loss2, ref2)

    # bf16 logits pass-through (halves HBM traffic); compare loosely against the f32 reference.
    loss_bf16 = jax.block_until_ready(
        compound_dice_focal(logits.astype(jnp.bfloat16), labels, weights, alpha, gamma=2))
    assert jnp.allclose(loss_bf16, ref, rtol=5e-2, atol=5e-2), (loss_bf16, ref)

    print("KERNEL_OK")
</pallas_src>

<mosaic_0001>
module attributes {stable_mosaic.version = 11 : i64} {
  func.func @_compound_dice_focal_kernel(%arg0: i32, %arg1: i32, %arg2: memref<1x4x256xf32, #tpu.memory_space<vmem>>, %arg3: memref<1x1x256xi32, #tpu.memory_space<vmem>>, %arg4: memref<4x1xf32, #tpu.memory_space<vmem>>, %arg5: memref<1x2x128xf32, #tpu.memory_space<vmem>>, %arg6: memref<4x128xf32, #tpu.memory_space<vmem>>, %arg7: memref<4x128xf32, #tpu.memory_space<vmem>>, %arg8: memref<4x128xf32, #tpu.memory_space<vmem>>, %arg9: memref<1x128xf32, #tpu.memory_space<vmem>>) attributes {dimension_semantics = [#tpu.dimension_semantics<parallel>, #tpu.dimension_semantics<arbitrary>], iteration_bounds = array<i64: 2, 1>, scalar_prefetch = 0 : i64, scratch_operands = 4 : i64, tpu.core_type = #tpu.core_type<tc>, window_params = [{transform_indices = @transform_0, window_bounds = array<i64: 1, 4, 256>}, {transform_indices = @transform_1, window_bounds = array<i64: 1, 1, 256>}, {pipeline_mode = #tpu.pipeline_mode<synchronous>, transform_indices = @transform_2, window_bounds = array<i64: 4, 1>}, {transform_indices = @transform_3, window_bounds = array<i64: 1, 2, 128>}]} {
    %c0_i32 = arith.constant 0 : i32
    %0 = arith.cmpi eq, %arg1, %c0_i32 : i32
    %1 = arith.extui %0 : i1 to i32
    %c0_i32_0 = arith.constant 0 : i32
    %2 = arith.cmpi ne, %1, %c0_i32_0 : i32
    scf.if %2 {
      %cst_35 = arith.constant 0.000000e+00 : f32
      %74 = vector.broadcast %cst_35 : f32 to vector<4x128xf32>
      %c0_36 = arith.constant 0 : index
      %c0_37 = arith.constant 0 : index
      %75 = vector.load %arg6[%c0_36, %c0_37] : memref<4x128xf32, #tpu.memory_space<vmem>>, vector<4x128xf32>
      tpu.vector_store %arg6[%c0_36, %c0_37], %74 {strides = array<i32>} : memref<4x128xf32, #tpu.memory_space<vmem>>, vector<4x128xf32>,
      %cst_38 = arith.constant 0.000000e+00 : f32
      %76 = vector.broadcast %cst_38 : f32 to vector<4x128xf32>
      %c0_39 = arith.constant 0 : index
      %c0_40 = arith.constant 0 : index
      %77 = vector.load %arg7[%c0_39, %c0_40] : memref<4x128xf32, #tpu.memory_space<vmem>>, vector<4x128xf32>
      tpu.vector_store %arg7[%c0_39, %c0_40], %76 {strides = array<i32>} : memref<4x128xf32, #tpu.memory_space<vmem>>, vector<4x128xf32>,
      %cst_41 = arith.constant 0.000000e+00 : f32
      %78 = vector.broadcast %cst_41 : f32 to vector<4x128xf32>
      %c0_42 = arith.constant 0 : index
      %c0_43 = arith.constant 0 : index
      %79 = vector.load %arg8[%c0_42, %c0_43] : memref<4x128xf32, #tpu.memory_space<vmem>>, vector<4x128xf32>
      tpu.vector_store %arg8[%c0_42, %c0_43], %78 {strides = array<i32>} : memref<4x128xf32, #tpu.memory_space<vmem>>, vector<4x128xf32>,
      %cst_44 = arith.constant 0.000000e+00 : f32
      %80 = vector.broadcast %cst_44 : f32 to vector<1x128xf32>
      %c0_45 = arith.constant 0 : index
      %c0_46 = arith.constant 0 : index
      %81 = vector.load %arg9[%c0_45, %c0_46] : memref<1x128xf32, #tpu.memory_space<vmem>>, vector<1x128xf32>
      tpu.vector_store %arg9[%c0_45, %c0_46], %80 {strides = array<i32>} : memref<1x128xf32, #tpu.memory_space<vmem>>, vector<1x128xf32>,
    } else {
    }
    %c0 = arith.constant 0 : index
    %c0_1 = arith.constant 0 : index
    %c0_2 = arith.constant 0 : index
    %3 = vector.load %arg2[%c0, %c0_1, %c0_2] : memref<1x4x256xf32, #tpu.memory_space<vmem>>, vector<1x4x256xf32>
    %4 = vector.shape_cast %3 : vector<1x4x256xf32> to vector<4x256xf32>
    %c0_3 = arith.constant 0 : index
    %c0_4 = arith.constant 0 : index
    %c0_5 = arith.constant 0 : index
    %5 = vector.load %arg3[%c0_3, %c0_4, %c0_5] : memref<1x1x256xi32, #tpu.memory_space<vmem>>, vector<1x1x256xi32>
    %6 = vector.shape_cast %5 : vector<1x1x256xi32> to vector<1x256xi32>
    %c0_6 = arith.constant 0 : index
    %c0_7 = arith.constant 0 : index
    %7 = vector.load %arg4[%c0_6, %c0_7] : memref<4x1xf32, #tpu.memory_space<vmem>>, vector<4x1xf32>
    %8 = tpu.iota {dimensions = array<i32: 0>} : vector<4x256xi32>
    %9 = vector.broadcast %6 : vector<1x256xi32> to vector<4x256xi32>
    %10 = arith.cmpi eq, %8, %9 : vector<4x256xi32>
    %11 = arith.extui %10 : vector<4x256xi1> to vector<4x256xi32>
    %12 = arith.sitofp %11 : vector<4x256xi32> to vector<4x256xf32>
    %cst = arith.constant dense<0xFF800000> : vector<256xf32>
    %13 = vector.multi_reduction <maximumf>, %4, %cst [0] : vector<4x256xf32> to vector<256xf32>
    %14 = vector.shape_cast %13 : vector<256xf32> to vector<1x256xf32>
    %15 = vector.broadcast %14 : vector<1x256xf32> to vector<4x256xf32>
    %16 = arith.subf %4, %15 : vector<4x256xf32>
    %17 = math.exp %16 : vector<4x256xf32>
    %cst_8 = arith.constant dense<0.000000e+00> : vector<256xf32>
    %18 = vector.multi_reduction <add>, %17, %cst_8 [0] : vector<4x256xf32> to vector<256xf32>
    %19 = vector.shape_cast %18 : vector<256xf32> to vector<1x256xf32>
    %20 = tpu.reciprocal %19 : vector<1x256xf32> -> vector<1x256xf32>
    %21 = vector.broadcast %20 : vector<1x256xf32> to vector<4x256xf32>
    %22 = arith.mulf %17, %21 : vector<4x256xf32>
    %23 = arith.mulf %22, %12 : vector<4x256xf32>
    %cst_9 = arith.constant dense<0.000000e+00> : vector<256xf32>
    %24 = vector.multi_reduction <add>, %23, %cst_9 [0] : vector<4x256xf32> to vector<256xf32>
    %25 = vector.shape_cast %24 : vector<256xf32> to vector<1x256xf32>
    %cst_10 = arith.constant 0.999989986 : f32
    %26 = vector.broadcast %cst_10 : f32 to vector<1x256xf32>
    %27 = arith.mulf %26, %25 : vector<1x256xf32>
    %cst_11 = arith.constant 1.000000e+00 : f32
    %28 = vector.broadcast %cst_11 : f32 to vector<1x256xf32>
    %29 = arith.subf %28, %25 : vector<1x256xf32>
    %cst_12 = arith.constant 3.33333332E-6 : f32
    %30 = vector.broadcast %cst_12 : f32 to vector<1x256xf32>
    %31 = arith.mulf %30, %29 : vector<1x256xf32>
    %32 = arith.addf %27, %31 : vector<1x256xf32>
    %cst_13 = arith.constant 9.99999974E-6 : f32
    %33 = vector.broadcast %cst_13 : f32 to vector<1x256xf32>
    %34 = arith.addf %32, %33 : vector<1x256xf32>
    %35 = math.log %34 : vector<1x256xf32>
    %cst_14 = arith.constant 1.000000e+00 : f32
    %36 = vector.broadcast %cst_14 : f32 to vector<1x256xf32>
    %37 = arith.subf %36, %34 : vector<1x256xf32>
    %38 = arith.mulf %37, %37 : vector<1x256xf32>
    %39 = vector.broadcast %7 : vector<4x1xf32> to vector<4x256xf32>
    %40 = arith.mulf %39, %12 : vector<4x256xf32>
    %cst_15 = arith.constant dense<0.000000e+00> : vector<256xf32>
    %41 = vector.multi_reduction <add>, %40, %cst_15 [0] : vector<4x256xf32> to vector<256xf32>
    %42 = vector.shape_cast %41 : vector<256xf32> to vector<1x256xf32>
    %cst_16 = arith.constant 0.000000e+00 : f32
    %43 = vector.broadcast %cst_16 : f32 to vector<1x256xf32>
    %44 = arith.subf %43, %42 : vector<1x256xf32>
    %45 = arith.mulf %44, %38 : vector<1x256xf32>
    %46 = arith.mulf %45, %35 : vector<1x256xf32>
    %c0_17 = arith.constant 0 : index
    %c0_18 = arith.constant 0 : index
    %47 = vector.load %arg9[%c0_17, %c0_18] : memref<1x128xf32, #tpu.memory_space<vmem>>, vector<1x128xf32>
    %48 = vector.extract_strided_slice %46 {offsets = [0, 0], sizes = [1, 128], strides = [1, 1]} : vector<1x256xf32> to vector<1x128xf32>
    %49 = vector.extract_strided_slice %46 {offsets = [0, 128], sizes = [1, 128], strides = [1, 1]} : vector<1x256xf32> to vector<1x128xf32>
    %50 = arith.addf %48, %49 : vector<1x128xf32>
    %51 = arith.addf %47, %50 : vector<1x128xf32>
    %c0_19 = arith.constant 0 : index
    %c0_20 = arith.constant 0 : index
    %52 = vector.load %arg9[%c0_19, %c0_20] : memref<1x128xf32, #tpu.memory_space<vmem>>, vector<1x128xf32>
    tpu.vector_store %arg9[%c0_19, %c0_20], %51 {strides = array<i32>} : memref<1x128xf32, #tpu.memory_space<vmem>>, vector<1x128xf32>,
    %c0_21 = arith.constant 0 : index
    %c0_22 = arith.constant 0 : index
    %53 = vector.load %arg6[%c0_21, %c0_22] : memref<4x128xf32, #tpu.memory_space<vmem>>, vector<4x128xf32>
    %54 = vector.extract_strided_slice %12 {offsets = [0, 0], sizes = [4, 128], strides = [1, 1]} : vector<4x256xf32> to vector<4x128xf32>
    %55 = vector.extract_strided_slice %12 {offsets = [0, 128], sizes = [4, 128], strides = [1, 1]} : vector<4x256xf32> to vector<4x128xf32>
    %56 = arith.addf %54, %55 : vector<4x128xf32>
    %57 = arith.addf %53, %56 : vector<4x128xf32>
    %c0_23 = arith.constant 0 : index
    %c0_24 = arith.constant 0 : index
    %58 = vector.load %arg6[%c0_23, %c0_24] : memref<4x128xf32, #tpu.memory_space<vmem>>, vector<4x128xf32>
    tpu.vector_store %arg6[%c0_23, %c0_24], %57 {strides = array<i32>} : memref<4x128xf32, #tpu.memory_space<vmem>>, vector<4x128xf32>,
    %c0_25 = arith.constant 0 : index
    %c0_26 = arith.constant 0 : index
    %59 = vector.load %arg7[%c0_25, %c0_26] : memref<4x128xf32, #tpu.memory_space<vmem>>, vector<4x128xf32>
    %60 = vector.extract_strided_slice %22 {offsets = [0, 0], sizes = [4, 128], strides = [1, 1]} : vector<4x256xf32> to vector<4x128xf32>
    %61 = vector.extract_strided_slice %22 {offsets = [0, 128], sizes = [4, 128], strides = [1, 1]} : vector<4x256xf32> to vector<4x128xf32>
    %62 = arith.addf %60, %61 : vector<4x128xf32>
    %63 = arith.addf %59, %62 : vector<4x128xf32>
    %c0_27 = arith.constant 0 : index
    %c0_28 = arith.constant 0 : index
    %64 = vector.load %arg7[%c0_27, %c0_28] : memref<4x128xf32, #tpu.memory_space<vmem>>, vector<4x128xf32>
    tpu.vector_store %arg7[%c0_27, %c0_28], %63 {strides = array<i32>} : memref<4x128xf32, #tpu.memory_space<vmem>>, vector<4x128xf32>,
    %c0_29 = arith.constant 0 : index
    %c0_30 = arith.constant 0 : index
    %65 = vector.load %arg8[%c0_29, %c0_30] : memref<4x128xf32, #tpu.memory_space<vmem>>, vector<4x128xf32>
    %66 = vector.extract_strided_slice %23 {offsets = [0, 0], sizes = [4, 128], strides = [1, 1]} : vector<4x256xf32> to vector<4x128xf32>
    %67 = vector.extract_strided_slice %23 {offsets = [0, 128], sizes = [4, 128], strides = [1, 1]} : vector<4x256xf32> to vector<4x128xf32>
    %68 = arith.addf %66, %67 : vector<4x128xf32>
    %69 = arith.addf %65, %68 : vector<4x128xf32>
    %c0_31 = arith.constant 0 : index
    %c0_32 = arith.constant 0 : index
    %70 = vector.load %arg8[%c0_31, %c0_32] : memref<4x128xf32, #tpu.memory_space<vmem>>, vector<4x128xf32>
    tpu.vector_store %arg8[%c0_31, %c0_32], %69 {strides = array<i32>} : memref<4x128xf32, #tpu.memory_space<vmem>>, vector<4x128xf32>,
    %c0_i32_33 = arith.constant 0 : i32
    %71 = arith.cmpi eq, %arg1, %c0_i32_33 : i32
    %72 = arith.extui %71 : i1 to i32
    %c0_i32_34 = arith.constant 0 : i32
    %73 = arith.cmpi ne, %72, %c0_i32_34 : i32
    scf.if %73 {
      %c0_35 = arith.constant 0 : index
      %c0_36 = arith.constant 0 : index
      %74 = vector.load %arg6[%c0_35, %c0_36] : memref<4x128xf32, #tpu.memory_space<vmem>>, vector<4x128xf32>
      %cst_37 = arith.constant dense<0.000000e+00> : vector<4xf32>
      %75 = vector.multi_reduction <add>, %74, %cst_37 [1] : vector<4x128xf32> to vector<4xf32>
      %76 = vector.shape_cast %75 : vector<4xf32> to vector<4x1xf32>
      %c0_38 = arith.constant 0 : index
      %c0_39 = arith.constant 0 : index
      %77 = vector.load %arg7[%c0_38, %c0_39] : memref<4x128xf32, #tpu.memory_space<vmem>>, vector<4x128xf32>
      %cst_40 = arith.constant dense<0.000000e+00> : vector<4xf32>
      %78 = vector.multi_reduction <add>, %77, %cst_40 [1] : vector<4x128xf32> to vector<4xf32>
      %79 = vector.shape_cast %78 : vector<4xf32> to vector<4x1xf32>
      %c0_41 = arith.constant 0 : index
      %c0_42 = arith.constant 0 : index
      %80 = vector.load %arg8[%c0_41, %c0_42] : memref<4x128xf32, #tpu.memory_space<vmem>>, vector<4x128xf32>
      %cst_43 = arith.constant dense<0.000000e+00> : vector<4xf32>
      %81 = vector.multi_reduction <add>, %80, %cst_43 [1] : vector<4x128xf32> to vector<4xf32>
      %82 = vector.shape_cast %81 : vector<4xf32> to vector<4x1xf32>
      %cst_44 = arith.constant 1.000000e-10 : f32
      %83 = vector.broadcast %cst_44 : f32 to vector<4x1xf32>
      %84 = arith.addf %76, %83 : vector<4x1xf32>
      %85 = arith.mulf %84, %84 : vector<4x1xf32>
      %cst_45 = arith.constant 1.000000e+00 : f32
      %86 = vector.broadcast %cst_45 : f32 to vector<4x1xf32>
      %87 = arith.divf %86, %85 : vector<4x1xf32>
      %88 = arith.mulf %87, %82 : vector<4x1xf32>
      %89 = vector.shape_cast %88 : vector<4x1xf32> to vector<1x4x1xf32>
      %cst_46 = arith.constant dense<0.000000e+00> : vector<1xf32>
      %90 = vector.multi_reduction <add>, %89, %cst_46 [1, 2] : vector<1x4x1xf32> to vector<1xf32>
      %91 = vector.shape_cast %90 : vector<1xf32> to vector<1x1x1xf32>
      %92 = vector.extract %91[0, 0, 0] : f32 from vector<1x1x1xf32>
      %93 = vector.broadcast %92 : f32 to vector<1x1xf32>
      %94 = arith.addf %79, %76 : vector<4x1xf32>
      %95 = arith.mulf %87, %94 : vector<4x1xf32>
      %96 = vector.shape_cast %95 : vector<4x1xf32> to vector<1x4x1xf32>
      %cst_47 = arith.constant dense<0.000000e+00> : vector<1xf32>
      %97 = vector.multi_reduction <add>, %96, %cst_47 [1, 2] : vector<1x4x1xf32> to vector<1xf32>
      %98 = vector.shape_cast %97 : vector<1xf32> to vector<1x1x1xf32>
      %99 = vector.extract %98[0, 0, 0] : f32 from vector<1x1x1xf32>
      %100 = vector.broadcast %99 : f32 to vector<1x1xf32>
      %cst_48 = arith.constant 9.99999974E-6 : f32
      %101 = vector.broadcast %cst_48 : f32 to vector<1x1xf32>
      %102 = arith.addf %93, %101 : vector<1x1xf32>
      %cst_49 = arith.constant -2.000000e+00 : f32
      %103 = vector.broadcast %cst_49 : f32 to vector<1x1xf32>
      %104 = arith.mulf %103, %102 : vector<1x1xf32>
      %cst_50 = arith.constant 9.99999974E-6 : f32
      %105 = vector.broadcast %cst_50 : f32 to vector<1x1xf32>
      %106 = arith.addf %100, %105 : vector<1x1xf32>
      %107 = arith.divf %104, %106 : vector<1x1xf32>
      %c0_51 = arith.constant 0 : index
      %c0_52 = arith.constant 0 : index
      %108 = vector.load %arg9[%c0_51, %c0_52] : memref<1x128xf32, #tpu.memory_space<vmem>>, vector<1x128xf32>
      %109 = vector.shape_cast %108 : vector<1x128xf32> to vector<1x1x128xf32>
      %cst_53 = arith.constant dense<0.000000e+00> : vector<1xf32>
      %110 = vector.multi_reduction <add>, %109, %cst_53 [1, 2] : vector<1x1x128xf32> to vector<1xf32>
      %111 = vector.shape_cast %110 : vector<1xf32> to vector<1x1x1xf32>
      %112 = vector.extract %111[0, 0, 0] : f32 from vector<1x1x1xf32>
      %113 = vector.broadcast %112 : f32 to vector<1x1xf32>
      %114 = vector.shape_cast %107 : vector<1x1xf32> to vector<1x1xf32>
      %115 = vector.broadcast %114 : vector<1x1xf32> to vector<1x128xf32>
      %116 = vector.shape_cast %113 : vector<1x1xf32> to vector<1x1xf32>
      %117 = vector.broadcast %116 : vector<1x1xf32> to vector<1x128xf32>
      %118 = tpu.concatenate %115, %117 in 0 : vector<1x128xf32>, vector<1x128xf32> -> vector<2x128xf32>
      %c0_54 = arith.constant 0 : index
      %c0_55 = arith.constant 0 : index
      %c0_56 = arith.constant 0 : index
      %119 = vector.load %arg5[%c0_54, %c0_55, %c0_56] : memref<1x2x128xf32, #tpu.memory_space<vmem>>, vector<1x2x128xf32>
      %120 = vector.shape_cast %119 : vector<1x2x128xf32> to vector<2x128xf32>
      %121 = vector.shape_cast %118 : vector<2x128xf32> to vector<1x2x128xf32>
      tpu.vector_store %arg5[%c0_54, %c0_55, %c0_56], %121 {strides = array<i32>} : memref<1x2x128xf32, #tpu.memory_space<vmem>>, vector<1x2x128xf32>,
    } else {
    }
    return
  }
  func.func @transform_0(%arg0: i32, %arg1: i32) -> (i32, i32, i32) {
    %c0_i32 = arith.constant 0 : i32
    %c0_i32_0 = arith.constant 0 : i32
    return %arg0, %c0_i32, %arg1 : i32, i32, i32
  }
  func.func @transform_1(%arg0: i32, %arg1: i32) -> (i32, i32, i32) {
    %c0_i32 = arith.constant 0 : i32
    %c0_i32_0 = arith.constant 0 : i32
    return %arg0, %c0_i32, %arg1 : i32, i32, i32
  }
  func.func @transform_2(%arg0: i32, %arg1: i32) -> (i32, i32) {
    %c0_i32 = arith.constant 0 : i32
    %c0_i32_0 = arith.constant 0 : i32
    %c0_i32_1 = arith.constant 0 : i32
    return %c0_i32, %c0_i32_0 : i32, i32
  }
  func.func @transform_3(%arg0: i32, %arg1: i32) -> (i32, i32, i32) {
    %c0_i32 = arith.constant 0 : i32
    %c0_i32_0 = arith.constant 0 : i32
    %c0_i32_1 = arith.constant 0 : i32
    return %arg0, %c0_i32, %c0_i32_0 : i32, i32, i32
  }
}

</mosaic_0001>

<llo_original>
// kernel: tpu_custom_call.1
$region0: #{tpu_custom_call.1}
  #allocation0 [shape = 'u32[]', space=smem, size = 0x4, offset = 0x4, fixed_abs, tag = 'smem constant byte address 0x4 - core index']
  #allocation1 [shape = 'u32[144,128]{1,0:T(1,128)}', space=vmem, size = 0x12000, scoped, tag = 'internal scratch']
  #allocation2 [shape = 'f32[4,128]{1,0:T(4,128)}', space=vmem, size = 0x800, scoped, tag = 'scratch operand']
  #allocation3 [shape = 'f32[4,128]{1,0:T(4,128)}', space=vmem, size = 0x800, scoped, tag = 'scratch operand']
  #allocation4 [shape = 'f32[4,128]{1,0:T(4,128)}', space=vmem, size = 0x800, scoped, tag = 'scratch operand']
  #allocation5 [shape = 'f32[1,128]{1,0:T(1,128)}', space=vmem, size = 0x200, scoped, tag = 'scratch operand']
  %s0 = inlined_call_operand.hbm [shape: f32[2,4,256], index: 0, kind: input, shape index: {}]
  %s1 = inlined_call_operand.vmem [shape: s32[2,1,256], index: 1, kind: input, shape index: {}]
  %s2 = inlined_call_operand.vmem [shape: f32[4,1], index: 2, kind: input, shape index: {}]
  %s3 = inlined_call_operand.hbm [shape: f32[2,2,128], index: 3, kind: output, shape index: {}]
  %s4 = sld [smem:[#allocation0]]
  $region57: #{tpu_custom_call.1} parent=0
    _
  %s6 = ssub.s32 1, %s4
  %s7 = scalar_select 0, %s6, %s4
  $region1: #{tpu_custom_call.1} parent=0
    #allocation6 [shape = 'u8[8192]{0}', space=vmem, size = 0x2000, scoped, tag = 'input window, operand 0']
    #allocation7 [shape = 's32[2]{0}', space=sflag, size = 0x8, scoped, tag = 'scoped memory for tpu_custom_call.1']
    #allocation8 [shape = 's32[2]{0}', space=sflag, size = 0x8, scoped, tag = 'scoped memory for tpu_custom_call.1']
    #allocation9 [shape = 'u8[2048]{0}', space=vmem, size = 0x800, scoped, tag = 'output window, operand 0']
    %8 = vsyncpa [#allocation7], 0
    %s9 = scalar_lea.sflag [#allocation7], 1
    %10 = vsyncpa %s9, 0
    %11 = vsyncpa [#allocation8], 0
    %s12 = scalar_lea.sflag [#allocation8], 1
    %13 = vsyncpa %s12, 0
    loop: start=0, step=1, limit=4
    $region2: #{tpu_custom_call.1} parent=1 // loop_pre_header
      _
    $region3: #{tpu_custom_call.1} parent=1 // loop_header
      %s15 = sphi 0, %s19
      %p16 = scmp.ge.s32.totalorder %s15, 4
      %s22 = sphi 0, %s34
      %s23 = sphi 0, %s30
      %s24 = sphi 0, %s22
      %s25 = sphi 0, %s23
      %s26 = sphi 0, %s24
      %s27 = sphi 0, %s25
      %s39 = sphi 0, %s41
      %s42 = sphi 0, %s39
      %s43 = sphi 0, %s42
      %s59 = sphi 0, %s43
      %s67 = sphi 0, %s69
      %s70 = sphi 0, %s67
      %s71 = sphi 0, %s70
      %s87 = sphi 0, %s71
      %s91 = sphi 0, %s91
      %s93 = sphi 0, %s91
      %s94 = sphi 0, %s93
      %s108 = sphi 0, %s94
      %s114 = sphi 0, %s116
      %s117 = sphi 0, %s114
      %s118 = sphi 0, %s117
      %s134 = sphi 0, %s118
    $region4: #{tpu_custom_call.1} parent=1 // loop_header_branch
      %18 = sbr.rel (%p16) target = $region8
    $region5: #{tpu_custom_call.1} parent=1 // loop_body
      %s20 = ssub.s32 %s15, 1
      %s21 = ssub.s32 %s15, 2
      %s28 = sadd.s32 1, %s23
      %p29 = scmp.ge.s32.totalorder %s28, 1
      %s30 = scalar_select %p29, 0, %s28
      %s31 = sadd.s32 1, %s22
      %s32 = scalar_select %p29, %s31, %s22
      %p33 = scmp.ge.s32.totalorder %s32, 2
      %s34 = scalar_select %p33, 0, %s32
      %s35 = ssub.s32 %s22, %s34
      %s36 = ssub.s32 %s23, %s30
      %s37 = sor.u32 %s35, %s36
      %p38 = scmp.eq.s32.totalorder %s37, 0
      %s40 = sadd.s32 %s39, 1
      %s41 = scalar_select %p38, %s39, %s40
      %p44 = pneg %p38
      %p45 = scmp.eq.s32.totalorder %s15, 1
      %p46 = por %p44, %p45
      %p47 = scmp.ne.s32.totalorder %s39, %s42
      %p48 = scmp.eq.s32.totalorder %s15, 0
      %p49 = por %p47, %p48
      %p50 = scmp.ne.s32.totalorder %s39, %s42
      %p51 = scmp.eq.s32.totalorder %s20, 1
      %p52 = por %p50, %p51
      %p53 = scmp.ne.s32.totalorder %s42, %s43
      %p54 = scmp.eq.s32.totalorder %s20, 0
      %p55 = por %p53, %p54
      %p56 = scmp.ne.s32.totalorder %s42, %s43
      %p57 = scmp.eq.s32.totalorder %s21, 1
      %p58 = por %p56, %p57
      %p60 = scmp.ne.s32.totalorder %s43, %s59
      %p61 = scmp.eq.s32.totalorder %s21, 0
      %p62 = por %p60, %p61
      %s63 = ssub.s32 %s22, %s34
      %s64 = ssub.s32 %s23, %s30
      %s65 = sor.u32 %s63, %s64
      %p66 = scmp.eq.s32.totalorder %s65, 0
      %s68 = sadd.s32 %s67, 1
      %s69 = scalar_select %p66, %s67, %s68
      %p72 = pneg %p66
      %p73 = scmp.eq.s32.totalorder %s15, 1
      %p74 = por %p72, %p73
      %p75 = scmp.ne.s32.totalorder %s67, %s70
      %p76 = scmp.eq.s32.totalorder %s15, 0
      %p77 = por %p75, %p76
      %p78 = scmp.ne.s32.totalorder %s67, %s70
      %p79 = scmp.eq.s32.totalorder %s20, 1
      %p80 = por %p78, %p79
      %p81 = scmp.ne.s32.totalorder %s70, %s71
      %p82 = scmp.eq.s32.totalorder %s20, 0
      %p83 = por %p81, %p82
      %p84 = scmp.ne.s32.totalorder %s70, %s71
      %p85 = scmp.eq.s32.totalorder %s21, 1
      %p86 = por %p84, %p85
      %p88 = scmp.ne.s32.totalorder %s71, %s87
      %p89 = scmp.eq.s32.totalorder %s21, 0
      %p90 = por %p88, %p89
      %s92 = sadd.s32 %s91, 1
      %p95 = scmp.eq.s32.totalorder %s15, 1
      %p96 = scmp.ne.s32.totalorder %s91, %s93
      %p97 = scmp.eq.s32.totalorder %s15, 0
      %p98 = por %p96, %p97
      %p99 = scmp.ne.s32.totalorder %s91, %s93
      %p100 = scmp.eq.s32.totalorder %s20, 1
      %p101 = por %p99, %p100
      %p102 = scmp.ne.s32.totalorder %s93, %s94
      %p103 = scmp.eq.s32.totalorder %s20, 0
      %p104 = por %p102, %p103
      %p105 = scmp.ne.s32.totalorder %s93, %s94
      %p106 = scmp.eq.s32.totalorder %s21, 1
      %p107 = por %p105, %p106
      %p109 = scmp.ne.s32.totalorder %s94, %s108
      %p110 = scmp.eq.s32.totalorder %s21, 0
      %p111 = por %p109, %p110
      %s112 = ssub.s32 %s22, %s34
      %p113 = scmp.eq.s32.totalorder %s112, 0
      %s115 = sadd.s32 %s114, 1
      %s116 = scalar_select %p113, %s114, %s115
      %p119 = pneg %p113
      %p120 = scmp.eq.s32.totalorder %s15, 1
      %p121 = por %p119, %p120
      %p122 = scmp.ne.s32.totalorder %s114, %s117
      %p123 = scmp.eq.s32.totalorder %s15, 0
      %p124 = por %p122, %p123
      %p125 = scmp.ne.s32.totalorder %s114, %s117
      %p126 = scmp.eq.s32.totalorder %s20, 1
      %p127 = por %p125, %p126
      %p128 = scmp.ne.s32.totalorder %s117, %s118
      %p129 = scmp.eq.s32.totalorder %s20, 0
      %p130 = por %p128, %p129
      %p131 = scmp.ne.s32.totalorder %s117, %s118
      %p132 = scmp.eq.s32.totalorder %s21, 1
      %p133 = por %p131, %p132
      %p135 = scmp.ne.s32.totalorder %s118, %s134
      %p136 = scmp.eq.s32.totalorder %s21, 0
      %p137 = por %p135, %p136
      %p138 = scmp.le.s32.totalorder 1, %s15
      %p139 = scmp.lt.s32.totalorder %s15, 3
      %p140 = pnand %p138, %p139
      %p141 = pneg %p140
      // Predicated region
      $region9: #{tpu_custom_call.1} parent=5 // pred_check
        _
      $region10: #{tpu_custom_call.1} parent=5 // pred_check_branch
        %143 = sbr.rel (%p140) target = $region12
      $region11: #{tpu_custom_call.1} parent=5 // pred_region
        %s144 = ssub.s32 %s15, 1
        // Predicated region
        $region13: #{tpu_custom_call.1} parent=11 // pred_check
          %p145 = pneg %p104
        $region14: #{tpu_custom_call.1} parent=11 // pred_check_branch
          %147 = sbr.rel (%p145) target = $region16
        $region15: #{tpu_custom_call.1} parent=11 // pred_region
          _
        $region16: #{tpu_custom_call.1} parent=11 // pred_fallthru
          _
      $region12: #{tpu_custom_call.1} parent=5 // pred_fallthru
        _
      %p148 = scmp.lt.s32.totalorder %s15, 2
      // Predicated region
      $region17: #{tpu_custom_call.1} parent=5 // pred_check
        %p149 = pneg %p148
      $region18: #{tpu_custom_call.1} parent=5 // pred_check_branch
        %151 = sbr.rel (%p149) target = $region20
      $region19: #{tpu_custom_call.1} parent=5 // pred_region
        // Predicated region
        $region21: #{tpu_custom_call.1} parent=19 // pred_check
          %p152 = pneg %p49
        $region22: #{tpu_custom_call.1} parent=19 // pred_check_branch
          %154 = sbr.rel (%p152) target = $region24
        $region23: #{tpu_custom_call.1} parent=19 // pred_region
          %s155 = sand.u32 %s39, 1
          %s156 = scalar_lea.sflag [#allocation7], %s155
          %s157 = sand.u32 %s39, 1
          %s158 = smul.addr %s157, 8
          %s159 = scalar_lea.vmem [#allocation6], %s158
          %s160 = smul.u32 2, %s23
          %s162 = ssub.s32 128, 128
          %163 = vsyncadd %s156, %s162
          %s164 = smul.addr %s22, 2
          %s165 = sadd.s32 %s160, %s164
          %s166 = smul.addr %s165, 64
          %s167 = scalar_lea.hbm %s0, %s166
          %s169 = sshll.u32 %s159, 4
          %s170 = int_to_ptr.vmem [resolvable:$true] %s169
          %172 = dma.hbm_to_vmem [thread:$0]  %s167, 128, %s170, %s156
        $region24: #{tpu_custom_call.1} parent=19 // pred_fallthru
          _
        // Predicated region
        $region25: #{tpu_custom_call.1} parent=19 // pred_check
          %p173 = pneg %p77
        $region26: #{tpu_custom_call.1} parent=19 // pred_check_branch
          %175 = sbr.rel (%p173) target = $region28
        $region27: #{tpu_custom_call.1} parent=19 // pred_region
          %s176 = smul.u32 2, %s23
          %p177 = scmp.lt.s32.totalorder %s22, 1
          %s178 = scalar_select %p177, %s22, 1
          %p179 = scmp.lt.s32.totalorder %s176, 1
          %s180 = scalar_select %p179, %s176, 1
          %s181 = smul.addr %s178, 2
          %s182 = sadd.s32 %s180, %s181
          %s183 = scalar_lea.vmem %s1, %s182
          %s184 = smul.u32 2, %s23
        $region28: #{tpu_custom_call.1} parent=19 // pred_fallthru
          _
      $region20: #{tpu_custom_call.1} parent=5 // pred_fallthru
        _
      %p185 = scmp.le.s32.totalorder 1, %s15
      %p186 = scmp.lt.s32.totalorder %s15, 3
      %p187 = pnand %p185, %p186
      %p188 = pneg %p187
      // Predicated region
      $region29: #{tpu_custom_call.1} parent=5 // pred_check
        _
      $region30: #{tpu_custom_call.1} parent=5 // pred_check_branch
        %190 = sbr.rel (%p187) target = $region32
      $region31: #{tpu_custom_call.1} parent=5 // pred_region
        %s191 = ssub.s32 %s15, 1
        %s192 = sand.u32 %s42, 1
        %s193 = scalar_lea.sflag [#allocation7], %s192
        %s194 = sand.u32 %s42, 1
        %s195 = smul.addr %s194, 8
        %s196 = scalar_lea.vmem [#allocation6], %s195
        // Predicated region
        $region33: #{tpu_custom_call.1} parent=31 // pred_check
          %p197 = pneg %p55
        $region34: #{tpu_custom_call.1} parent=31 // pred_check_branch
          %199 = sbr.rel (%p197) target = $region36
        $region35: #{tpu_custom_call.1} parent=31 // pred_region
          %200 = dma.done %s193, 128
        $region36: #{tpu_custom_call.1} parent=31 // pred_fallthru
          _
        %s201 = sand.u32 %s42, 1
        %s202 = scalar_lea.sflag [#allocation7], %s201
        %s203 = sand.u32 %s42, 1
        %s204 = smul.addr %s203, 8
        %s205 = scalar_lea.vmem [#allocation6], %s204
        %p206 = pneg %p55
        %p207 = pneg %p52
        %s208 = smul.u32 2, %s25
        %p209 = scmp.lt.s32.totalorder %s24, 1
        %s210 = scalar_select %p209, %s24, 1
        %p211 = scmp.lt.s32.totalorder %s208, 1
        %s212 = scalar_select %p211, %s208, 1
        %s213 = smul.addr %s210, 2
        %s214 = sadd.s32 %s212, %s213
        %s215 = scalar_lea.vmem %s1, %s214
        %p216 = pneg %p83
        %p217 = pneg %p80
        %p218 = pneg %p104
        %p219 = pneg %p101
        %p220 = pneg %p130
        %p221 = pneg %p127
        %s222 = sand.u32 %s117, 1
        %s223 = scalar_lea.sflag [#allocation8], %s222
        %s224 = sand.u32 %s117, 1
        %s225 = smul.addr %s224, 2
        %s226 = scalar_lea.vmem [#allocation9], %s225
        %s227 = smul.u32 2, %s25
        %s228 = smul.u32 2, %s25
        %p229 = scmp.lt.s32.totalorder %s24, 1
        %s230 = scalar_select %p229, %s24, 1
        %p231 = scmp.lt.s32.totalorder %s228, 1
        %s232 = scalar_select %p231, %s228, 1
        %s233 = smul.addr %s230, 2
        %s234 = sadd.s32 %s232, %s233
        %s235 = scalar_lea.vmem %s1, %s234
        %s236 = smul.u32 2, %s25
        %p237 = scmp.eq.s32.totalorder %s25, 0
        // Predicated region
        $region37: #{tpu_custom_call.1} parent=31 // pred_check
          %p238 = pneg %p237
        $region38: #{tpu_custom_call.1} parent=31 // pred_check_branch
          %240 = sbr.rel (%p238) target = $region40
        $region39: #{tpu_custom_call.1} parent=31 // pred_region
          %241 = vst [vmem:[#allocation2] sm:$0xf] 0.0
          %242 = vst [vmem:[#allocation3] sm:$0xf] 0.0
          %243 = vst [vmem:[#allocation4] sm:$0xf] 0.0
          %244 = vst [vmem:[#allocation5] sm:$0x1] 0.0
        $region40: #{tpu_custom_call.1} parent=31 // pred_fallthru
          _
        %v245 = vld [vmem:[%s196] sm:$0xff]
        %v246 = vld [vmem:[%s235] sm:$0x3]
        %v247 = vld [vmem:[%s2] sm:$0xf]
        %v248 = vlaneseq
        %v249 = vshrl.u32 %v248, 7
        %v250 = vlaneseq
        %v251 = vshrl.u32 %v250, 7
        %v252 = vsub.s32 0, %v251
        %v253 = vrot.slane %v246, %v252
        %v254 = vlaneseq
        %v255 = vshrl.u32 %v254, 7
        %v256 = vsub.s32 1, %v255
        %v257 = vrot.slane %v246, %v256
        %vm258 = vcmp.eq.s32.totalorder %v249, %v253
        %vm259 = vcmp.eq.s32.totalorder %v249, %v257
        %v260 = vsel %vm258, 1, 0
        %v261 = vsel %vm259, 1, 0
        %v262 = vcvt.s32.f32 %v260
        %v263 = vcvt.s32.f32 %v261
        %v265 = vcombine.high %v245, %v245
        %vm267 = vcmask 1043456
        %v268 = vsel %vm267, %v245, -inf
        %v269 = vrot.slane %v268, 4
        %v270 = vmax.f32 %v268, %v269
        %v271 = vrot.slane %v270, 2
        %v272 = vmax.f32 %v270, %v271
        %v273 = vrot.slane %v272, 1
        %v274 = vmax.f32 %v272, %v273
        %v275 = vsel %vm267, %v265, -inf
        %v276 = vrot.slane %v275, 4
        %v277 = vmax.f32 %v275, %v276
        %v278 = vrot.slane %v277, 2
        %v279 = vmax.f32 %v277, %v278
        %v280 = vrot.slane %v279, 1
        %v281 = vmax.f32 %v279, %v280
        %v284 = vcombine.low %v274, %v281
        %v286 = vsub.f32 %v245, %v284
        %v287 = vmul.f32 %v286, 1.442695
        %v288 = vpow.pop %v287
        %v290 = vcombine.high %v288, %v288
        %v292 = vsel %vm267, %v288, 0.0
        %v293 = vrot.slane %v292, 4
        %v294 = vadd.f32 %v292, %v293
        %v295 = vrot.slane %v294, 2
        %v296 = vadd.f32 %v294, %v295
        %v297 = vrot.slane %v296, 1
        %v298 = vadd.f32 %v296, %v297
        %v299 = vsel %vm267, %v290, 0.0
        %v300 = vrot.slane %v299, 4
        %v301 = vadd.f32 %v299, %v300
        %v302 = vrot.slane %v301, 2
        %v303 = vadd.f32 %v301, %v302
        %v304 = vrot.slane %v303, 1
        %v305 = vadd.f32 %v303, %v304
        %v306 = vrcp.pop %v298
        %v307 = vrcp.pop %v305
        %v310 = vcombine.low %v306, %v307
        %v312 = vmul.f32 %v288, %v310
        %v315 = vcombine.low %v262, %v263
        %v317 = vmul.f32 %v312, %v315
        %v319 = vcombine.high %v317, %v317
        %v321 = vsel %vm267, %v317, 0.0
        %v322 = vrot.slane %v321, 4
        %v323 = vadd.f32 %v321, %v322
        %v324 = vrot.slane %v323, 2
        %v325 = vadd.f32 %v323, %v324
        %v326 = vrot.slane %v325, 1
        %v327 = vadd.f32 %v325, %v326
        %v328 = vsel %vm267, %v319, 0.0
        %v329 = vrot.slane %v328, 4
        %v330 = vadd.f32 %v328, %v329
        %v331 = vrot.slane %v330, 2
        %v332 = vadd.f32 %v330, %v331
        %v333 = vrot.slane %v332, 1
        %v334 = vadd.f32 %v332, %v333
        %v335 = vmul.f32 %v327, 0.99999
        %v336 = vmul.f32 %v334, 0.99999
        %v337 = vsub.f32 1.0, %v327
        %v338 = vsub.f32 1.0, %v334
        %v339 = vmul.f32 %v337, 3.3333333e-06
        %v340 = vmul.f32 %v338, 3.3333333e-06
        %v341 = vadd.f32 %v335, %v339
        %v342 = vadd.f32 %v336, %v340
        %v343 = vadd.f32 %v341, 1e-05
        %v344 = vadd.f32 %v342, 1e-05
        %v345 = vlog2.pop %v343
        %v346 = vmul.f32 %v345, 0.6931472
        %v347 = vlog2.pop %v344
        %v348 = vmul.f32 %v347, 0.6931472
        %v349 = vsub.f32 1.0, %v343
        %v350 = vsub.f32 1.0, %v344
        %v351 = vmul.f32 %v349, %v349
        %v352 = vmul.f32 %v350, %v350
        %354 = vset.pattern.permute.xlu0 0
        %355 = vperm.xlu0 %354, %v247
        %v356 = vpop.permute.xlu0 %355
        %v358 = vmul.f32 %v356, %v262
        %v359 = vmul.f32 %v356, %v263
        %v360 = vsel %vm267, %v358, 0.0
        %v361 = vrot.slane %v360, 4
        %v362 = vadd.f32 %v360, %v361
        %v363 = vrot.slane %v362, 2
        %v364 = vadd.f32 %v362, %v363
        %v365 = vrot.slane %v364, 1
        %v366 = vadd.f32 %v364, %v365
        %v367 = vsel %vm267, %v359, 0.0
        %v368 = vrot.slane %v367, 4
        %v369 = vadd.f32 %v367, %v368
        %v370 = vrot.slane %v369, 2
        %v371 = vadd.f32 %v369, %v370
        %v372 = vrot.slane %v371, 1
        %v373 = vadd.f32 %v371, %v372
        %v374 = vsub.f32 0.0, %v366
        %v375 = vsub.f32 0.0, %v373
        %v376 = vmul.f32 %v374, %v351
        %v377 = vmul.f32 %v375, %v352
        %v378 = vmul.f32 %v376, %v346
        %v379 = vmul.f32 %v377, %v348
        %v380 = vld [vmem:[#allocation5] sm:$0x1]
        %v381 = vadd.f32 %v378, %v379
        %v382 = vadd.f32 %v380, %v381
        %383 = vst [vmem:[#allocation5] sm:$0x1] %v382
        %v384 = vld [vmem:[#allocation2] sm:$0xf]
        %v385 = vadd.f32 %v262, %v263
        %v386 = vadd.f32 %v384, %v385
        %387 = vst [vmem:[#allocation2] sm:$0xf] %v386
        %v388 = vld [vmem:[#allocation3] sm:$0xf]
        %v390 = vrot.slane %v312, 4
        %v392 = vadd.f32 %v312, %v390
        %v393 = vadd.f32 %v388, %v392
        %394 = vst [vmem:[#allocation3] sm:$0xf] %v393
        %v395 = vld [vmem:[#allocation4] sm:$0xf]
        %v396 = vrot.slane %v317, 4
        %v398 = vadd.f32 %v317, %v396
        %v399 = vadd.f32 %v395, %v398
        %400 = vst [vmem:[#allocation4] sm:$0xf] %v399
        // Predicated region
        $region41: #{tpu_custom_call.1} parent=31 // pred_check
          %p401 = pneg %p237
        $region42: #{tpu_custom_call.1} parent=31 // pred_check_branch
          %403 = sbr.rel (%p401) target = $region44
        $region43: #{tpu_custom_call.1} parent=31 // pred_region
          %v404 = vld [vmem:[#allocation2] sm:$0xf]
          %v405 = vsel %vm267, %v404, 0.0
          %406 = vadd.xlane.f32.xlu0 %v405
          %v407 = vpop.xlane.xlu0 %406
          %v408 = vld [vmem:[#allocation3] sm:$0xf]
          %v409 = vsel %vm267, %v408, 0.0
          %410 = vadd.xlane.f32.xlu0 %v409
          %v411 = vpop.xlane.xlu0 %410
          %v412 = vld [vmem:[#allocation4] sm:$0xf]
          %v413 = vsel %vm267, %v412, 0.0
          %414 = vadd.xlane.f32.xlu0 %v413
          %v415 = vpop.xlane.xlu0 %414
          %v416 = vadd.f32 %v407, 1e-10
          %v417 = vmul.f32 %v416, %v416
          %v418 = vrcp.pop %v417
          %v419 = vmul.f32 1.0, %v418
          %v420 = vmul.f32 %v419, %v415
          %vm421 = vcmask 3072
          %v422 = vsel %vm421, %v420, 0.0
          %423 = vadd.xlane.f32.xlu0 %v422
          %v424 = vpop.xlane.xlu0 %423
          %v425 = vrot.slane %v424, 4
          %v426 = vadd.f32 %v424, %v425
          %v427 = vrot.slane %v426, 2
          %v428 = vadd.f32 %v426, %v427
          %v429 = vrot.slane %v428, 1
          %v430 = vadd.f32 %v428, %v429
          %s431 = vtos %v430
          %v432 = vstv %s431
          %v433 = vadd.f32 %v411, %v407
          %v434 = vmul.f32 %v419, %v433
          %v435 = vsel %vm421, %v434, 0.0
          %436 = vadd.xlane.f32.xlu0 %v435
          %v437 = vpop.xlane.xlu0 %436
          %v438 = vrot.slane %v437, 4
          %v439 = vadd.f32 %v437, %v438
          %v440 = vrot.slane %v439, 2
          %v441 = vadd.f32 %v439, %v440
          %v442 = vrot.slane %v441, 1
          %v443 = vadd.f32 %v441, %v442
          %s444 = vtos %v443
          %v445 = vstv %s444
          %v446 = vadd.f32 %v432, 1e-05
          %v447 = vmul.f32 %v446, -2.0
          %v448 = vadd.f32 %v445, 1e-05
          %v449 = vrcp.pop %v448
          %v450 = vmul.f32 %v447, %v449
          %v451 = vld [vmem:[#allocation5] sm:$0x1]
          %vm452 = vcmask 1040384
          %v453 = vsel %vm452, %v451, 0.0
          %454 = vadd.xlane.f32.xlu0 %v453
          %v455 = vpop.xlane.xlu0 %454
          %v456 = vrot.slane %v455, 4
          %v457 = vadd.f32 %v455, %v456
          %v458 = vrot.slane %v457, 2
          %v459 = vadd.f32 %v457, %v458
          %v460 = vrot.slane %v459, 1
          %v461 = vadd.f32 %v459, %v460
          %s462 = vtos %v461
          %v463 = vstv %s462
          %v464 = vsel %vm452, %v450, %v463
          %465 = vst [vmem:[%s226] sm:$0x3] %v464
        $region44: #{tpu_custom_call.1} parent=31 // pred_fallthru
          _
        %s466 = sand.u32 %s117, 1
        %s467 = scalar_lea.sflag [#allocation8], %s466
        %s468 = sand.u32 %s117, 1
        %s469 = smul.addr %s468, 2
        %s470 = scalar_lea.vmem [#allocation9], %s469
        // Predicated region
        $region45: #{tpu_custom_call.1} parent=31 // pred_check
          %p471 = pneg %p127
        $region46: #{tpu_custom_call.1} parent=31 // pred_check_branch
          %473 = sbr.rel (%p471) target = $region48
        $region47: #{tpu_custom_call.1} parent=31 // pred_region
          %s475 = ssub.s32 32, 32
          %476 = vsyncadd %s467, %s475
          %s477 = smul.addr %s24, 32
          %s478 = scalar_lea.hbm %s3, %s477
          %s480 = sshll.u32 %s470, 4
          %s481 = int_to_ptr.vmem [resolvable:$true] %s480
          %483 = dma.vmem_to_hbm [thread:$0]  %s481, 32, %s478, %s467
        $region48: #{tpu_custom_call.1} parent=31 // pred_fallthru
          _
      $region32: #{tpu_custom_call.1} parent=5 // pred_fallthru
        _
      %p484 = scmp.le.s32.totalorder 2, %s15
      // Predicated region
      $region49: #{tpu_custom_call.1} parent=5 // pred_check
        %p485 = pneg %p484
      $region50: #{tpu_custom_call.1} parent=5 // pred_check_branch
        %487 = sbr.rel (%p485) target = $region52
      $region51: #{tpu_custom_call.1} parent=5 // pred_region
        %s488 = ssub.s32 %s15, 2
        // Predicated region
        $region53: #{tpu_custom_call.1} parent=51 // pred_check
          %p489 = pneg %p133
        $region54: #{tpu_custom_call.1} parent=51 // pred_check_branch
          %491 = sbr.rel (%p489) target = $region56
        $region55: #{tpu_custom_call.1} parent=51 // pred_region
          %s492 = sand.u32 %s118, 1
          %s493 = scalar_lea.sflag [#allocation8], %s492
          %s494 = sand.u32 %s118, 1
          %s495 = smul.addr %s494, 2
          %s496 = scalar_lea.vmem [#allocation9], %s495
          %497 = dma.done %s493, 32
        $region56: #{tpu_custom_call.1} parent=51 // pred_fallthru
          _
      $region52: #{tpu_custom_call.1} parent=5 // pred_fallthru
        _
    $region6: #{tpu_custom_call.1} parent=1 // loop_footer
      %s19 = sadd.s32 1, %s15
    $region7: #{tpu_custom_call.1} parent=1 // loop_footer_branch
      %14 = sbr.rel target = $region3
    $region8: #{tpu_custom_call.1} parent=1 // loop_exit
      _
    %498 = vsyncpa [#allocation7], 1
    %s499 = scalar_lea.sflag [#allocation7], 1
    %500 = vsyncpa %s499, 1
    %501 = vsyncpa [#allocation8], 1
    %s502 = scalar_lea.sflag [#allocation8], 1
    %503 = vsyncpa %s502, 1

</llo_original>
